<compile_context>
chip_gen: v6e
topology: v6e:2x2x1
jax: 0.10.0
libtpu: 0.0.40
codegen_flags: <defaults>
</compile_context>

<pallas_src>
import jax
import jax.numpy as jnp
from jax import lax
from jax.experimental import pallas as pl
from jax.experimental.pallas import tpu as pltpu


def _round_up(x, m):
    return (x + m - 1) // m * m


# ---------------------------------------------------------------------------
# Kernels
# ---------------------------------------------------------------------------

def batch_q_kernel(x_ref, w1_ref, b1_ref, w2_ref, b2_ref, q_ref):
    """One batch lane-tile of Q(s, a).

    x_ref : (TB, D_tot) stacked [obs | act] rows (natural layout)
    w1_ref: (H, D_tot)  fused first-layer weight
    b1_ref: (H, 1)      first-layer bias (column)
    w2_ref: (1, H)      second-layer weight (row)
    b2_ref: (1, 1)
    q_ref : (1, TB)     lane-dense Q output for this tile
    """
    # Single fused first-layer matmul, batch on the lane axis:
    # (H, D_tot) x (TB, D_tot) contracted over D_tot -> (H, TB).
    pre = lax.dot_general(
        w1_ref[...], x_ref[...],
        dimension_numbers=(((1,), (1,)), ((), ())),
        preferred_element_type=jnp.float32)
    h = jnp.maximum(pre + b1_ref[...], 0.0)                          # (H, TB)
    # Second layer also on the MXU: (1, H) @ (H, TB) -> (1, TB); K = H = 128
    # fully fills the MXU K dim and keeps the VALU/XLU out of the reduction.
    q_ref[...] = (jnp.dot(w2_ref[...], h, preferred_element_type=jnp.float32)
                  + b2_ref[...])


def greedy_kernel(nv_ref, obs_ref, act_ref,
                  w1o_ref, w1a_ref, b1_ref, w2_ref, b2_ref,
                  qmax_ref, idx_ref):
    """max / argmax of Q over one env's candidate actions (stop action last).

    nv_ref : (E,) int32 SMEM (scalar prefetch: candidates+stop per env)
    obs_ref: (1, D_obs)          act_ref: (A_pad, D_act)
    w1o_ref: (H, D_obs)  w1a_ref: (H, D_act)  b1_ref: (H, 1)
    w2_ref : (1, H)      b2_ref : (1, 1)
    qmax_ref, idx_ref: (1, 1)
    """
    e = pl.program_id(0)
    n_valid = nv_ref[e]

    # Obs contribution once per env as an (H, 1) column (cheap lane reduce;
    # avoids replicating obs A_pad times or an N=1 MXU matmul).
    hobs = jnp.sum(w1o_ref[...] * obs_ref[...], axis=1, keepdims=True)   # (H, 1)

    # Candidate contribution on the MXU (natural (A_pad, D_act) layout):
    pre = lax.dot_general(
        w1a_ref[...], act_ref[...],
        dimension_numbers=(((1,), (1,)), ((), ())),
        preferred_element_type=jnp.float32)                              # (H, A_pad)
    h = jnp.maximum(pre + hobs + b1_ref[...], 0.0)
    q = (jnp.dot(w2_ref[...], h, preferred_element_type=jnp.float32)
         + b2_ref[...])                                                  # (1, A_pad)

    col = lax.broadcasted_iota(jnp.int32, q.shape, 1)
    q = jnp.where(col < n_valid, q, -jnp.inf)                            # mask pad

    qmax = jnp.max(q, axis=(0, 1), keepdims=True)                        # (1, 1)
    qmax_ref[...] = qmax
    # First column attaining the max: matches the base class's strict '<'
    # updates (a candidate beats the stop action on an exact tie).
    # TODO(synk): NaN Q values make `q >= qmax` all-false and idx falls back
    # to n_valid; guard upstream if NaNs are possible.
    idx_ref[...] = jnp.min(jnp.where(q >= qmax, col, n_valid),
                           axis=(0, 1), keepdims=True)


# ---------------------------------------------------------------------------
# Wrappers (pallas_call glue)
# ---------------------------------------------------------------------------

def batch_forward_and_loss(obs, act, y, params):
    """obs:(B, D_obs), act:(B, D_act), y:(B,) -> (q:(B,), loss: scalar)."""
    w1o_t, w1a_t, b1_col, w2_row, b2 = params
    B, d_obs = obs.shape
    d_act = act.shape[1]
    H = w1o_t.shape[0]
    d_tot = d_obs + d_act

    # Fused first-layer weight (tiny (H, D_tot) concat).
    w1 = jnp.concatenate([w1o_t, w1a_t], axis=1)

    # Stacked activation slab in natural (B, D_tot) layout -- no HBM transpose.
    # (In production, assemble the training batch directly as this stacked
    # slab so the concat is part of batch construction, not an extra copy.)
    x = jnp.concatenate([obs, act], axis=1)

    # Large lane tiles amortize the fixed per-grid-step cost; VMEM stays tiny
    # (~1 MB of (H, TB) intermediate + <1 MB of double-buffered input).
    TB = min(2048, _round_up(B, 128))
    B_pad = _round_up(B, TB)
    x_pad = jnp.pad(x, ((0, B_pad - B), (0, 0)))
    n_tiles = B_pad // TB

    q_row = pl.pallas_call(
        batch_q_kernel,
        out_shape=jax.ShapeDtypeStruct((1, B_pad), jnp.float32),
        grid=(n_tiles,),
        # Weight blocks have constant block indices -> the pipeline keeps them
        # resident and does not re-DMA them per tile.
        in_specs=[pl.BlockSpec((TB, d_tot), lambda i: (i, 0)),
                  pl.BlockSpec((H, d_tot), lambda i: (0, 0)),
                  pl.BlockSpec((H, 1), lambda i: (0, 0)),
                  pl.BlockSpec((1, H), lambda i: (0, 0)),
                  pl.BlockSpec((1, 1), lambda i: (0, 0))],
        out_specs=pl.BlockSpec((1, TB), lambda i: (0, i)),
        # No in-kernel loss accumulator -> the batch-tile axis is fully
        # parallel (shards across both TensorCores on v7x).
        compiler_params=pltpu.CompilerParams(
            dimension_semantics=("parallel",)),
    )(x_pad, w1, b1_col, w2_row, b2)

    q = q_row[0, :B]
    # MSE outside the kernel: trivial (B,) f32 reduction, normalized by the
    # TRUE batch size; also removes padded-column masking from the hot loop.
    loss = jnp.sum((q - y) ** 2) / B
    return q, loss


def build_candidate_slab(candidate_actions_list, d_act):
    """Pack per-env candidate sets into one (E, A_pad, D_act) slab.

    Call once per env batch (NOT per greedy step).  The stop action (zero
    vector) is the LAST valid row of each env, mirroring the base class's
    q_stop comparison order; remaining rows are zero padding.
    Returns (slab, n_valid) with n_valid[e] = #candidates + 1 (stop).
    """
    E = len(candidate_actions_list)
    n_valid = jnp.array([int(a.shape[0]) + 1 for a in candidate_actions_list],
                        jnp.int32)
    max_cand = max(int(a.shape[0]) for a in candidate_actions_list) + 1
    a_pad = _round_up(max_cand, 128)
    slab = jnp.zeros((E, a_pad, d_act), jnp.float32)
    for e, a in enumerate(candidate_actions_list):
        slab = slab.at[e, :a.shape[0]].set(a.astype(jnp.float32))
        # stop action == all-zero row at index a.shape[0] (already zeros).
    return slab, n_valid


def greedy_forward_batched(obs_batch, act_slab, n_valid, params):
    """obs_batch:(E, D_obs), act_slab:(E, A_pad, D_act), n_valid:(E,) int32
    -> (q_max:(E,), argmax:(E,) index into [candidates..., stop])."""
    w1o_t, w1a_t, b1_col, w2_row, b2 = params
    E, d_obs = obs_batch.shape
    a_pad, d_act = act_slab.shape[1:]
    H = w1o_t.shape[0]

    obs3 = obs_batch.reshape(E, 1, d_obs)

    grid_spec = pltpu.PrefetchScalarGridSpec(
        num_scalar_prefetch=1,                  # per-env candidate counts
        grid=(E,),
        in_specs=[pl.BlockSpec((None, 1, d_obs), lambda e, nv: (e, 0, 0)),
                  pl.BlockSpec((None, a_pad, d_act), lambda e, nv: (e, 0, 0)),
                  pl.BlockSpec((H, d_obs), lambda e, nv: (0, 0)),
                  pl.BlockSpec((H, d_act), lambda e, nv: (0, 0)),
                  pl.BlockSpec((H, 1), lambda e, nv: (0, 0)),
                  pl.BlockSpec((1, H), lambda e, nv: (0, 0)),
                  pl.BlockSpec((1, 1), lambda e, nv: (0, 0))],
        out_specs=(pl.BlockSpec((None, 1, 1), lambda e, nv: (e, 0, 0)),
                   pl.BlockSpec((None, 1, 1), lambda e, nv: (e, 0, 0))),
    )

    q_max, best_idx = pl.pallas_call(
        greedy_kernel,
        out_shape=(jax.ShapeDtypeStruct((E, 1, 1), jnp.float32),
                   jax.ShapeDtypeStruct((E, 1, 1), jnp.int32)),
        grid_spec=grid_spec,
        compiler_params=pltpu.CompilerParams(
            dimension_semantics=("parallel",)),
    )(n_valid, obs3, act_slab, w1o_t, w1a_t, b1_col, w2_row, b2)

    return q_max[:, 0, 0], best_idx[:, 0, 0]


# ---------------------------------------------------------------------------
# Deterministic parameter init + pure-JAX reference + demo
# ---------------------------------------------------------------------------

def init_params(key, d_obs, d_act, hidden):
    """Weights stored in the layouts the kernels consume: W1_obs^T (H, D_obs),
    W1_act^T (H, D_act), b1 (H,1), w2 as a (1,H) row, b2 (1,1)."""
    k1, k2, k3, k4, k5 = jax.random.split(key, 5)
    w1_obs_t = jax.random.normal(k1, (hidden, d_obs), jnp.float32) * 0.1
    w1_act_t = jax.random.normal(k2, (hidden, d_act), jnp.float32) * 0.1
    b1_col = jax.random.normal(k3, (hidden, 1), jnp.float32) * 0.01
    w2_row = jax.random.normal(k4, (1, hidden), jnp.float32) * 0.1
    b2 = jax.random.normal(k5, (1, 1), jnp.float32) * 0.01
    return w1_obs_t, w1_act_t, b1_col, w2_row, b2


def _reference_q(obs, act, params):
    w1o_t, w1a_t, b1_col, w2_row, b2 = params
    pre = obs @ w1o_t.T + act @ w1a_t.T + b1_col.T
    h = jnp.maximum(pre, 0.0)
    return (h @ w2_row.T + b2)[:, 0]            # (B,)


if __name__ == "__main__":
    B, D_OBS, D_ACT, HIDDEN = 8, 16, 16, 128

    key = jax.random.PRNGKey(0)
    k_p, k_o, k_a, k_y, k_go, k_ga = jax.random.split(key, 6)
    params = init_params(k_p, D_OBS, D_ACT, HIDDEN)

    # ---- batch_forward + loss path ----
    obs_b = jax.random.normal(k_o, (B, D_OBS), jnp.float32)
    act_b = jax.random.normal(k_a, (B, D_ACT), jnp.float32)
    y = jax.random.normal(k_y, (B,), jnp.float32)

    q, loss = batch_forward_and_loss(obs_b, act_b, y, params)
    jax.block_until_ready((q, loss))

    q_ref = _reference_q(obs_b, act_b, params)
    loss_ref = jnp.sum((q_ref - y) ** 2) / B
    assert jnp.allclose(q, q_ref, atol=1e-3), "q mismatch"
    assert jnp.allclose(loss, loss_ref, atol=1e-3), "loss mismatch"

    # ---- greedy_forward path (batched over environments) ----
    E = 2
    n_cands = (5, 8)
    obs_g = jax.random.normal(k_go, (E, D_OBS), jnp.float32)
    cand_pool = jax.random.normal(k_ga, (E, max(n_cands), D_ACT), jnp.float32)
    cand_list = [cand_pool[e, :n_cands[e]] for e in range(E)]

    act_slab, n_valid = build_candidate_slab(cand_list, D_ACT)
    q_max, best_idx = greedy_forward_batched(obs_g, act_slab, n_valid, params)
    jax.block_until_ready((q_max, best_idx))

    for e in range(E):
        all_act = jnp.concatenate(
            [cand_list[e], jnp.zeros((1, D_ACT), jnp.float32)], axis=0)
        obs_rep = jnp.broadcast_to(obs_g[e][None, :], (all_act.shape[0], D_OBS))
        qa_ref = _reference_q(obs_rep, all_act, params)
        assert jnp.allclose(q_max[e], jnp.max(qa_ref), atol=1e-3), "q_max mismatch"
        assert int(best_idx[e]) == int(jnp.argmax(qa_ref)), "argmax mismatch"

    # TODO(synk): `fit` (optimizer step / backward) and the abstract
    # action_space iteration are training-loop / host glue with no Pallas
    # forward equivalent; only forward/loss/greedy compute is implemented.
    print("KERNEL_OK")
</pallas_src>

<mosaic_0001>
module attributes {stable_mosaic.version = 11 : i64} {
  func.func @batch_q_kernel(%arg0: i32, %arg1: memref<128x32xf32, #tpu.memory_space<vmem>>, %arg2: memref<128x32xf32, #tpu.memory_space<vmem>>, %arg3: memref<128x1xf32, #tpu.memory_space<vmem>>, %arg4: memref<1x128xf32, #tpu.memory_space<vmem>>, %arg5: memref<1x1xf32, #tpu.memory_space<vmem>>, %arg6: memref<1x128xf32, #tpu.memory_space<vmem>>) attributes {dimension_semantics = [#tpu.dimension_semantics<parallel>], iteration_bounds = array<i64: 1>, scalar_prefetch = 0 : i64, scratch_operands = 0 : i64, tpu.core_type = #tpu.core_type<tc>, window_params = [{transform_indices = @transform_0, window_bounds = array<i64: 128, 32>}, {pipeline_mode = #tpu.pipeline_mode<synchronous>, transform_indices = @transform_1, window_bounds = array<i64: 128, 32>}, {pipeline_mode = #tpu.pipeline_mode<synchronous>, transform_indices = @transform_2, window_bounds = array<i64: 128, 1>}, {pipeline_mode = #tpu.pipeline_mode<synchronous>, transform_indices = @transform_3, window_bounds = array<i64: 1, 128>}, {pipeline_mode = #tpu.pipeline_mode<synchronous>, transform_indices = @transform_4, window_bounds = array<i64: 1, 1>}, {transform_indices = @transform_5, window_bounds = array<i64: 1, 128>}]} {
    %c0 = arith.constant 0 : index
    %c0_0 = arith.constant 0 : index
    %0 = vector.load %arg2[%c0, %c0_0] : memref<128x32xf32, #tpu.memory_space<vmem>>, vector<128x32xf32>
    %c0_1 = arith.constant 0 : index
    %c0_2 = arith.constant 0 : index
    %1 = vector.load %arg1[%c0_1, %c0_2] : memref<128x32xf32, #tpu.memory_space<vmem>>, vector<128x32xf32>
    %cst = arith.constant dense<0.000000e+00> : vector<128x128xf32>
    %2 = tpu.matmul %0, %1, %cst {dimension_numbers = #tpu.dot_dimension_numbers<[1], [1], [0], [0], [0, 0, 1, 0], [], []>} : vector<128x32xf32>, vector<128x32xf32>, vector<128x128xf32> -> vector<128x128xf32>
    %c0_3 = arith.constant 0 : index
    %c0_4 = arith.constant 0 : index
    %3 = vector.load %arg3[%c0_3, %c0_4] : memref<128x1xf32, #tpu.memory_space<vmem>>, vector<128x1xf32>
    %4 = vector.broadcast %3 : vector<128x1xf32> to vector<128x128xf32>
    %5 = arith.addf %2, %4 : vector<128x128xf32>
    %cst_5 = arith.constant 0.000000e+00 : f32
    %6 = vector.broadcast %cst_5 : f32 to vector<128x128xf32>
    %7 = arith.maximumf %5, %6 : vector<128x128xf32>
    %c0_6 = arith.constant 0 : index
    %c0_7 = arith.constant 0 : index
    %8 = vector.load %arg4[%c0_6, %c0_7] : memref<1x128xf32, #tpu.memory_space<vmem>>, vector<1x128xf32>
    %cst_8 = arith.constant dense<0.000000e+00> : vector<1x128xf32>
    %9 = tpu.matmul %8, %7, %cst_8 {dimension_numbers = #tpu.dot_dimension_numbers<[1], [0], [0], [1], [0, 0, 1, 1], [], []>} : vector<1x128xf32>, vector<128x128xf32>, vector<1x128xf32> -> vector<1x128xf32>
    %c0_9 = arith.constant 0 : index
    %c0_10 = arith.constant 0 : index
    %10 = vector.load %arg5[%c0_9, %c0_10] : memref<1x1xf32, #tpu.memory_space<vmem>>, vector<1x1xf32>
    %11 = vector.broadcast %10 : vector<1x1xf32> to vector<1x128xf32>
    %12 = arith.addf %9, %11 : vector<1x128xf32>
    %c0_11 = arith.constant 0 : index
    %c0_12 = arith.constant 0 : index
    %13 = vector.load %arg6[%c0_11, %c0_12] : memref<1x128xf32, #tpu.memory_space<vmem>>, vector<1x128xf32>
    tpu.vector_store %arg6[%c0_11, %c0_12], %12 {strides = array<i32>} : memref<1x128xf32, #tpu.memory_space<vmem>>, vector<1x128xf32>,
    return
  }
  func.func @transform_0(%arg0: i32) -> (i32, i32) {
    %c0_i32 = arith.constant 0 : i32
    %c0_i32_0 = arith.constant 0 : i32
    return %arg0, %c0_i32 : i32, i32
  }
  func.func @transform_1(%arg0: i32) -> (i32, i32) {
    %c0_i32 = arith.constant 0 : i32
    %c0_i32_0 = arith.constant 0 : i32
    %c0_i32_1 = arith.constant 0 : i32
    return %c0_i32, %c0_i32_0 : i32, i32
  }
  func.func @transform_2(%arg0: i32) -> (i32, i32) {
    %c0_i32 = arith.constant 0 : i32
    %c0_i32_0 = arith.constant 0 : i32
    %c0_i32_1 = arith.constant 0 : i32
    return %c0_i32, %c0_i32_0 : i32, i32
  }
  func.func @transform_3(%arg0: i32) -> (i32, i32) {
    %c0_i32 = arith.constant 0 : i32
    %c0_i32_0 = arith.constant 0 : i32
    %c0_i32_1 = arith.constant 0 : i32
    return %c0_i32, %c0_i32_0 : i32, i32
  }
  func.func @transform_4(%arg0: i32) -> (i32, i32) {
    %c0_i32 = arith.constant 0 : i32
    %c0_i32_0 = arith.constant 0 : i32
    %c0_i32_1 = arith.constant 0 : i32
    return %c0_i32, %c0_i32_0 : i32, i32
  }
  func.func @transform_5(%arg0: i32) -> (i32, i32) {
    %c0_i32 = arith.constant 0 : i32
    %c0_i32_0 = arith.constant 0 : i32
    return %c0_i32, %arg0 : i32, i32
  }
}

</mosaic_0001>

<llo_original>
// kernel: tpu_custom_call.1
$region0: #{tpu_custom_call.1}
  #allocation0 [shape = 'u32[]', space=smem, size = 0x4, offset = 0x4, fixed_abs, tag = 'smem constant byte address 0x4 - core index']
  #allocation1 [shape = 'u32[144,128]{1,0:T(1,128)}', space=vmem, size = 0x12000, scoped, tag = 'internal scratch']
  #allocation2 [shape = 'f32[1,1]{1,0:T(1,128)S(1)}', space=vmem, size = 0x200, scoped, tag = 'scoped memory for tpu_custom_call.1']
  %s0 = inlined_call_operand.vmem [shape: f32[128,32], index: 0, kind: input, shape index: {}]
  %s1 = inlined_call_operand.vmem [shape: f32[128,32], index: 1, kind: input, shape index: {}]
  %s2 = inlined_call_operand.vmem [shape: f32[128,1], index: 2, kind: input, shape index: {}]
  %s3 = inlined_call_operand.vmem [shape: f32[1,128], index: 3, kind: input, shape index: {}]
  %s4 = inlined_call_operand.<no memory space> [shape: f32[1,1], index: 4, kind: input, shape index: {}]
  %s5 = inlined_call_operand.hbm [shape: f32[1,128], index: 5, kind: output, shape index: {}]
  %s6 = sld [smem:[#allocation0]]
  $region30: #{tpu_custom_call.1} parent=0
    _
  %s8 = ssub.s32 1, %s6
  %s9 = scalar_select 0, %s8, %s6
  %v10 = vstv %s4
  %11 = vst [vmem:[#allocation2] sm:$0x1] %v10
  $region1: #{tpu_custom_call.1} parent=0
    #allocation3 [shape = 'u8[512]{0}', space=vmem, size = 0x400, scoped, tag = 'output window, operand 0, single buffered']
    #allocation4 [shape = 's32[1]{0}', space=sflag, size = 0x4, scoped, tag = 'scoped memory for tpu_custom_call.1']
    %12 = vsyncpa [#allocation4], 0
    // Predicated region
    $region2: #{tpu_custom_call.1} parent=1 // pred_check
      _
    $region3: #{tpu_custom_call.1} parent=1 // pred_check_branch
      %14 = sbr.rel (0) target = $region5
    $region4: #{tpu_custom_call.1} parent=1 // pred_region
      _
    $region5: #{tpu_custom_call.1} parent=1 // pred_fallthru
      _
    // Predicated region
    $region6: #{tpu_custom_call.1} parent=1 // pred_check
      _
    $region7: #{tpu_custom_call.1} parent=1 // pred_check_branch
      %16 = sbr.rel (0) target = $region9
    $region8: #{tpu_custom_call.1} parent=1 // pred_region
      _
    $region9: #{tpu_custom_call.1} parent=1 // pred_fallthru
      _
    // Predicated region
    $region10: #{tpu_custom_call.1} parent=1 // pred_check
      _
    $region11: #{tpu_custom_call.1} parent=1 // pred_check_branch
      %18 = sbr.rel (0) target = $region13
    $region12: #{tpu_custom_call.1} parent=1 // pred_region
      _
    $region13: #{tpu_custom_call.1} parent=1 // pred_fallthru
      _
    // Predicated region
    $region14: #{tpu_custom_call.1} parent=1 // pred_check
      _
    $region15: #{tpu_custom_call.1} parent=1 // pred_check_branch
      %20 = sbr.rel (0) target = $region17
    $region16: #{tpu_custom_call.1} parent=1 // pred_region
      _
    $region17: #{tpu_custom_call.1} parent=1 // pred_fallthru
      _
    // Predicated region
    $region18: #{tpu_custom_call.1} parent=1 // pred_check
      _
    $region19: #{tpu_custom_call.1} parent=1 // pred_check_branch
      %22 = sbr.rel (0) target = $region21
    $region20: #{tpu_custom_call.1} parent=1 // pred_region
      _
    $region21: #{tpu_custom_call.1} parent=1 // pred_fallthru
      _
    %v23 = vld [vmem:[%s1] sm:$0xff]
    %v24 = vld [vmem:[%s1 + $0x8] sm:$0xff]
    %v25 = vld [vmem:[%s1 + $0x10] sm:$0xff]
    %v26 = vld [vmem:[%s1 + $0x18] sm:$0xff]
    %v27 = vld [vmem:[%s1 + $0x20] sm:$0xff]
    %v28 = vld [vmem:[%s1 + $0x28] sm:$0xff]
    %v29 = vld [vmem:[%s1 + $0x30] sm:$0xff]
    %v30 = vld [vmem:[%s1 + $0x38] sm:$0xff]
    %v31 = vld [vmem:[%s1 + $0x40] sm:$0xff]
    %v32 = vld [vmem:[%s1 + $0x48] sm:$0xff]
    %v33 = vld [vmem:[%s1 + $0x50] sm:$0xff]
    %v34 = vld [vmem:[%s1 + $0x58] sm:$0xff]
    %v35 = vld [vmem:[%s1 + $0x60] sm:$0xff]
    %v36 = vld [vmem:[%s1 + $0x68] sm:$0xff]
    %v37 = vld [vmem:[%s1 + $0x70] sm:$0xff]
    %v38 = vld [vmem:[%s1 + $0x78] sm:$0xff]
    %v39 = vld [vmem:[%s0] sm:$0xff]
    %v40 = vld [vmem:[%s0 + $0x8] sm:$0xff]
    %v41 = vld [vmem:[%s0 + $0x10] sm:$0xff]
    %v42 = vld [vmem:[%s0 + $0x18] sm:$0xff]
    %v43 = vld [vmem:[%s0 + $0x20] sm:$0xff]
    %v44 = vld [vmem:[%s0 + $0x28] sm:$0xff]
    %v45 = vld [vmem:[%s0 + $0x30] sm:$0xff]
    %v46 = vld [vmem:[%s0 + $0x38] sm:$0xff]
    %v47 = vld [vmem:[%s0 + $0x40] sm:$0xff]
    %v48 = vld [vmem:[%s0 + $0x48] sm:$0xff]
    %v49 = vld [vmem:[%s0 + $0x50] sm:$0xff]
    %v50 = vld [vmem:[%s0 + $0x58] sm:$0xff]
    %v51 = vld [vmem:[%s0 + $0x60] sm:$0xff]
    %v52 = vld [vmem:[%s0 + $0x68] sm:$0xff]
    %v53 = vld [vmem:[%s0 + $0x70] sm:$0xff]
    %v54 = vld [vmem:[%s0 + $0x78] sm:$0xff]
    %v55 = vld [vmem:[%s2] sm:$0xff]
    %v56 = vld [vmem:[%s2 + $0x8] sm:$0xff]
    %v57 = vld [vmem:[%s2 + $0x10] sm:$0xff]
    %v58 = vld [vmem:[%s2 + $0x18] sm:$0xff]
    %v59 = vld [vmem:[%s2 + $0x20] sm:$0xff]
    %v60 = vld [vmem:[%s2 + $0x28] sm:$0xff]
    %v61 = vld [vmem:[%s2 + $0x30] sm:$0xff]
    %v62 = vld [vmem:[%s2 + $0x38] sm:$0xff]
    %v63 = vld [vmem:[%s2 + $0x40] sm:$0xff]
    %v64 = vld [vmem:[%s2 + $0x48] sm:$0xff]
    %v65 = vld [vmem:[%s2 + $0x50] sm:$0xff]
    %v66 = vld [vmem:[%s2 + $0x58] sm:$0xff]
    %v67 = vld [vmem:[%s2 + $0x60] sm:$0xff]
    %v68 = vld [vmem:[%s2 + $0x68] sm:$0xff]
    %v69 = vld [vmem:[%s2 + $0x70] sm:$0xff]
    %v70 = vld [vmem:[%s2 + $0x78] sm:$0xff]
    %72 = vset.pattern.permute.xlu0 0
    %73 = vperm.xlu0 %72, %v55
    %v74 = vpop.permute.xlu0 %73
    %77 = vset.pattern.permute.xlu0 0
    %78 = vperm.xlu0 %77, %v56
    %v79 = vpop.permute.xlu0 %78
    %82 = vset.pattern.permute.xlu0 0
    %83 = vperm.xlu0 %82, %v57
    %v84 = vpop.permute.xlu0 %83
    %87 = vset.pattern.permute.xlu0 0
    %88 = vperm.xlu0 %87, %v58
    %v89 = vpop.permute.xlu0 %88
    %92 = vset.pattern.permute.xlu0 0
    %93 = vperm.xlu0 %92, %v59
    %v94 = vpop.permute.xlu0 %93
    %97 = vset.pattern.permute.xlu0 0
    %98 = vperm.xlu0 %97, %v60
    %v99 = vpop.permute.xlu0 %98
    %102 = vset.pattern.permute.xlu0 0
    %103 = vperm.xlu0 %102, %v61
    %v104 = vpop.permute.xlu0 %103
    %107 = vset.pattern.permute.xlu0 0
    %108 = vperm.xlu0 %107, %v62
    %v109 = vpop.permute.xlu0 %108
    %112 = vset.pattern.permute.xlu0 0
    %113 = vperm.xlu0 %112, %v63
    %v114 = vpop.permute.xlu0 %113
    %117 = vset.pattern.permute.xlu0 0
    %118 = vperm.xlu0 %117, %v64
    %v119 = vpop.permute.xlu0 %118
    %122 = vset.pattern.permute.xlu0 0
    %123 = vperm.xlu0 %122, %v65
    %v124 = vpop.permute.xlu0 %123
    %127 = vset.pattern.permute.xlu0 0
    %128 = vperm.xlu0 %127, %v66
    %v129 = vpop.permute.xlu0 %128
    %132 = vset.pattern.permute.xlu0 0
    %133 = vperm.xlu0 %132, %v67
    %v134 = vpop.permute.xlu0 %133
    %137 = vset.pattern.permute.xlu0 0
    %138 = vperm.xlu0 %137, %v68
    %v139 = vpop.permute.xlu0 %138
    %142 = vset.pattern.permute.xlu0 0
    %143 = vperm.xlu0 %142, %v69
    %v144 = vpop.permute.xlu0 %143
    %147 = vset.pattern.permute.xlu0 0
    %148 = vperm.xlu0 %147, %v70
    %v149 = vpop.permute.xlu0 %148
    %vm151 = vcmask 261120
    %v153 = vsel %vm151, %v23, 0
    %v156 = vsel %vm151, %v24, 0
    %v159 = vsel %vm151, %v25, 0
    %v162 = vsel %vm151, %v26, 0
    %v165 = vsel %vm151, %v27, 0
    %v168 = vsel %vm151, %v28, 0
    %v171 = vsel %vm151, %v29, 0
    %v174 = vsel %vm151, %v30, 0
    %v177 = vsel %vm151, %v31, 0
    %v180 = vsel %vm151, %v32, 0
    %v183 = vsel %vm151, %v33, 0
    %v186 = vsel %vm151, %v34, 0
    %v189 = vsel %vm151, %v35, 0
    %v192 = vsel %vm151, %v36, 0
    %v195 = vsel %vm151, %v37, 0
    %v198 = vsel %vm151, %v38, 0
    %v201 = vsel %vm151, %v39, 0
    %v204 = vsel %vm151, %v40, 0
    %v207 = vsel %vm151, %v41, 0
    %v210 = vsel %vm151, %v42, 0
    %v213 = vsel %vm151, %v43, 0
    %v216 = vsel %vm151, %v44, 0
    %v219 = vsel %vm151, %v45, 0
    %v222 = vsel %vm151, %v46, 0
    %v225 = vsel %vm151, %v47, 0
    %v228 = vsel %vm151, %v48, 0
    %v231 = vsel %vm151, %v49, 0
    %v234 = vsel %vm151, %v50, 0
    %v237 = vsel %vm151, %v51, 0
    %v240 = vsel %vm151, %v52, 0
    %v243 = vsel %vm151, %v53, 0
    %v246 = vsel %vm151, %v54, 0
    %248 = vmatprep.subr.mxu0 0.0
    %249 = vmatpush1.xpose.msra.mxu0 %v246
    %250 = vmatprep.subr.mxu0 0.0
    %251 = vmatpush1.xpose.msra.mxu0 %v243
    %252 = vmatprep.subr.mxu0 0.0
    %253 = vmatpush1.xpose.msra.mxu0 %v240
    %254 = vmatprep.subr.mxu0 0.0
    %255 = vmatpush1.xpose.msra.mxu0 %v237
    %256 = vmatprep.subr.mxu0 0.0
    %257 = vmatpush1.xpose.msra.mxu0 %v234
    %258 = vmatprep.subr.mxu0 0.0
    %259 = vmatpush1.xpose.msra.mxu0 %v231
    %260 = vmatprep.subr.mxu0 0.0
    %261 = vmatpush1.xpose.msra.mxu0 %v228
    %262 = vmatprep.subr.mxu0 0.0
    %263 = vmatpush1.xpose.msra.mxu0 %v225
    %264 = vmatprep.subr.mxu0 0.0
    %265 = vmatpush1.xpose.msra.mxu0 %v222
    %266 = vmatprep.subr.mxu0 0.0
    %267 = vmatpush1.xpose.msra.mxu0 %v219
    %268 = vmatprep.subr.mxu0 0.0
    %269 = vmatpush1.xpose.msra.mxu0 %v216
    %270 = vmatprep.subr.mxu0 0.0
    %271 = vmatpush1.xpose.msra.mxu0 %v213
    %272 = vmatprep.subr.mxu0 0.0
    %273 = vmatpush1.xpose.msra.mxu0 %v210
    %274 = vmatprep.subr.mxu0 0.0
    %275 = vmatpush1.xpose.msra.mxu0 %v207
    %276 = vmatprep.subr.mxu0 0.0
    %277 = vmatpush1.xpose.msra.mxu0 %v204
    %278 = vmatprep.subr.mxu0 0.0
    %279 = vmatpush1.xpose.msra.mxu0 %v201
    %280 = vmatprep.subr.mxu0 0.0
    %281 = vmatpush2.xpose.msra.mxu0 0.0
    %282 = vmatprep.subr.mxu0 0.0
    %283 = vmatpush2.xpose.msra.mxu0 0.0
    %284 = vmatprep.subr.mxu0 0.0
    %285 = vmatpush2.xpose.msra.mxu0 0.0
    %286 = vmatprep.subr.mxu0 0.0
    %287 = vmatpush2.xpose.msra.mxu0 0.0
    %288 = vmatprep.subr.mxu0 0.0
    %289 = vmatpush2.xpose.msra.mxu0 0.0
    %290 = vmatprep.subr.mxu0 0.0
    %291 = vmatpush2.xpose.msra.mxu0 0.0
    %292 = vmatprep.subr.mxu0 0.0
    %293 = vmatpush2.xpose.msra.mxu0 0.0
    %294 = vmatprep.subr.mxu0 0.0
    %295 = vmatpush2.xpose.msra.mxu0 0.0
    %296 = vmatprep.subr.mxu0 0.0
    %297 = vmatpush2.xpose.msra.mxu0 0.0
    %298 = vmatprep.subr.mxu0 0.0
    %299 = vmatpush2.xpose.msra.mxu0 0.0
    %300 = vmatprep.subr.mxu0 0.0
    %301 = vmatpush2.xpose.msra.mxu0 0.0
    %302 = vmatprep.subr.mxu0 0.0
    %303 = vmatpush2.xpose.msra.mxu0 0.0
    %304 = vmatprep.subr.mxu0 0.0
    %305 = vmatpush2.xpose.msra.mxu0 0.0
    %306 = vmatprep.subr.mxu0 0.0
    %307 = vmatpush2.xpose.msra.mxu0 0.0
    %308 = vmatprep.subr.mxu0 0.0
    %309 = vmatpush2.xpose.msra.mxu0 0.0
    %310 = vmatprep.subr.mxu0 0.0
    %311 = vmatpush2.xpose.msra.mxu0 0.0
    %312 = vmatprep.mubr.f32.mxu0 0.0
    %313 = vmatmul.mubr.f32.gmra.mxu0 %v153
    %v314 = vpop.f32.mrf.mxu0
    %v315 = vadd.f32 %v74, %v314
    %v316 = vpop.f32.mrf.mxu0
    %317 = vmatprep.mubr.f32.mxu0 0.0
    %318 = vmatmul.mubr.f32.gmra.mxu0 %v156
    %v319 = vpop.f32.mrf.mxu0
    %v320 = vadd.f32 %v79, %v319
    %v321 = vpop.f32.mrf.mxu0
    %322 = vmatprep.mubr.f32.mxu0 0.0
    %323 = vmatmul.mubr.f32.gmra.mxu0 %v159
    %v324 = vpop.f32.mrf.mxu0
    %v325 = vadd.f32 %v84, %v324
    %v326 = vpop.f32.mrf.mxu0
    %327 = vmatprep.mubr.f32.mxu0 0.0
    %328 = vmatmul.mubr.f32.gmra.mxu0 %v162
    %v329 = vpop.f32.mrf.mxu0
    %v330 = vadd.f32 %v89, %v329
    %v331 = vpop.f32.mrf.mxu0
    %332 = vmatprep.mubr.f32.mxu0 0.0
    %333 = vmatmul.mubr.f32.gmra.mxu0 %v165
    %v334 = vpop.f32.mrf.mxu0
    %v335 = vadd.f32 %v94, %v334
    %v336 = vpop.f32.mrf.mxu0
    %337 = vmatprep.mubr.f32.mxu0 0.0
    %338 = vmatmul.mubr.f32.gmra.mxu0 %v168
    %v339 = vpop.f32.mrf.mxu0
    %v340 = vadd.f32 %v99, %v339
    %v341 = vpop.f32.mrf.mxu0
    %342 = vmatprep.mubr.f32.mxu0 0.0
    %343 = vmatmul.mubr.f32.gmra.mxu0 %v171
    %v344 = vpop.f32.mrf.mxu0
    %v345 = vadd.f32 %v104, %v344
    %v346 = vpop.f32.mrf.mxu0
    %347 = vmatprep.mubr.f32.mxu0 0.0
    %348 = vmatmul.mubr.f32.gmra.mxu0 %v174
    %v349 = vpop.f32.mrf.mxu0
    %v350 = vadd.f32 %v109, %v349
    %v351 = vpop.f32.mrf.mxu0
    %352 = vmatprep.mubr.f32.mxu0 0.0
    %353 = vmatmul.mubr.f32.gmra.mxu0 %v177
    %v354 = vpop.f32.mrf.mxu0
    %v355 = vadd.f32 %v114, %v354
    %v356 = vpop.f32.mrf.mxu0
    %357 = vmatprep.mubr.f32.mxu0 0.0
    %358 = vmatmul.mubr.f32.gmra.mxu0 %v180
    %v359 = vpop.f32.mrf.mxu0
    %v360 = vadd.f32 %v119, %v359
    %v361 = vpop.f32.mrf.mxu0
    %362 = vmatprep.mubr.f32.mxu0 0.0
    %363 = vmatmul.mubr.f32.gmra.mxu0 %v183
    %v364 = vpop.f32.mrf.mxu0
    %v365 = vadd.f32 %v124, %v364
    %v366 = vpop.f32.mrf.mxu0
    %367 = vmatprep.mubr.f32.mxu0 0.0
    %368 = vmatmul.mubr.f32.gmra.mxu0 %v186
    %v369 = vpop.f32.mrf.mxu0
    %v370 = vadd.f32 %v129, %v369
    %v371 = vpop.f32.mrf.mxu0
    %372 = vmatprep.mubr.f32.mxu0 0.0
    %373 = vmatmul.mubr.f32.gmra.mxu0 %v189
    %v374 = vpop.f32.mrf.mxu0
    %v375 = vadd.f32 %v134, %v374
    %v376 = vpop.f32.mrf.mxu0
    %377 = vmatprep.mubr.f32.mxu0 0.0
    %378 = vmatmul.mubr.f32.gmra.mxu0 %v192
    %v379 = vpop.f32.mrf.mxu0
    %v380 = vadd.f32 %v139, %v379
    %v381 = vpop.f32.mrf.mxu0
    %382 = vmatprep.mubr.f32.mxu0 0.0
    %383 = vmatmul.mubr.f32.gmra.mxu0 %v195
    %v384 = vpop.f32.mrf.mxu0
    %v385 = vadd.f32 %v144, %v384
    %v386 = vpop.f32.mrf.mxu0
    %387 = vmatprep.mubr.f32.mxu0 0.0
    %388 = vmatmul.mubr.f32.gmra.mxu0 %v198
    %v389 = vpop.f32.mrf.mxu0
    %v390 = vadd.f32 %v149, %v389
    %v391 = vpop.f32.mrf.mxu0
    %392 = vdwg.mxu0
    %v393 = vmax.f32 %v315, 0.0
    %v394 = vmax.f32 %v320, 0.0
    %v395 = vmax.f32 %v325, 0.0
    %v396 = vmax.f32 %v330, 0.0
    %v397 = vmax.f32 %v335, 0.0
    %v398 = vmax.f32 %v340, 0.0
    %v399 = vmax.f32 %v345, 0.0
    %v400 = vmax.f32 %v350, 0.0
    %v401 = vmax.f32 %v355, 0.0
    %v402 = vmax.f32 %v360, 0.0
    %v403 = vmax.f32 %v365, 0.0
    %v404 = vmax.f32 %v370, 0.0
    %v405 = vmax.f32 %v375, 0.0
    %v406 = vmax.f32 %v380, 0.0
    %v407 = vmax.f32 %v385, 0.0
    %v408 = vmax.f32 %v390, 0.0
    %v409 = vld [vmem:[%s3] sm:$0x1]
    %v410 = vld [vmem:[#allocation2] sm:$0x1]
    %412 = vset.pattern.permute.xlu0 0
    %413 = vperm.xlu0 %412, %v410
    %v414 = vpop.permute.xlu0 %413
    %v416 = vlaneseq
    %v417 = vshrl.u32 %v416, 7
    %v418 = vsub.s32 0, %v417
    %v419 = vrot.slane %v414, %v418
    %420 = vmatprep.subr.mxu0 0.0
    %421 = vmatpush1.msra.mxu0 %v408
    %422 = vmatprep.subr.mxu0 0.0
    %423 = vmatpush1.msra.mxu0 %v407
    %424 = vmatprep.subr.mxu0 0.0
    %425 = vmatpush1.msra.mxu0 %v406
    %426 = vmatprep.subr.mxu0 0.0
    %427 = vmatpush1.msra.mxu0 %v405
    %428 = vmatprep.subr.mxu0 0.0
    %429 = vmatpush1.msra.mxu0 %v404
    %430 = vmatprep.subr.mxu0 0.0
    %431 = vmatpush1.msra.mxu0 %v403
    %432 = vmatprep.subr.mxu0 0.0
    %433 = vmatpush1.msra.mxu0 %v402
    %434 = vmatprep.subr.mxu0 0.0
    %435 = vmatpush1.msra.mxu0 %v401
    %436 = vmatprep.subr.mxu0 0.0
    %437 = vmatpush1.msra.mxu0 %v400
    %438 = vmatprep.subr.mxu0 0.0
    %439 = vmatpush1.msra.mxu0 %v399
    %440 = vmatprep.subr.mxu0 0.0
    %441 = vmatpush1.msra.mxu0 %v398
    %442 = vmatprep.subr.mxu0 0.0
    %443 = vmatpush1.msra.mxu0 %v397
    %444 = vmatprep.subr.mxu0 0.0
    %445 = vmatpush1.msra.mxu0 %v396
    %446 = vmatprep.subr.mxu0 0.0
    %447 = vmatpush1.msra.mxu0 %v395
    %448 = vmatprep.subr.mxu0 0.0
    %449 = vmatpush1.msra.mxu0 %v394
    %450 = vmatprep.subr.mxu0 0.0
    %451 = vmatpush1.msra.mxu0 %v393
    %452 = vmatprep.subr.mxu0 0.0
    %453 = vmatpush2.msra.mxu0 0.0
    %454 = vmatprep.subr.mxu0 0.0
    %455 = vmatpush2.msra.mxu0 0.0
    %456 = vmatprep.subr.mxu0 0.0
    %457 = vmatpush2.msra.mxu0 0.0
    %458 = vmatprep.subr.mxu0 0.0
    %459 = vmatpush2.msra.mxu0 0.0
    %460 = vmatprep.subr.mxu0 0.0
    %461 = vmatpush2.msra.mxu0 0.0
    %462 = vmatprep.subr.mxu0 0.0
    %463 = vmatpush2.msra.mxu0 0.0
    %464 = vmatprep.subr.mxu0 0.0
    %465 = vmatpush2.msra.mxu0 0.0
    %466 = vmatprep.subr.mxu0 0.0
    %467 = vmatpush2.msra.mxu0 0.0
    %468 = vmatprep.subr.mxu0 0.0
    %469 = vmatpush2.msra.mxu0 0.0
    %470 = vmatprep.subr.mxu0 0.0
    %471 = vmatpush2.msra.mxu0 0.0
    %472 = vmatprep.subr.mxu0 0.0
    %473 = vmatpush2.msra.mxu0 0.0
    %474 = vmatprep.subr.mxu0 0.0
    %475 = vmatpush2.msra.mxu0 0.0
    %476 = vmatprep.subr.mxu0 0.0
    %477 = vmatpush2.msra.mxu0 0.0
    %478 = vmatprep.subr.mxu0 0.0
    %479 = vmatpush2.msra.mxu0 0.0
    %480 = vmatprep.subr.mxu0 0.0
    %481 = vmatpush2.msra.mxu0 0.0
    %482 = vmatprep.subr.mxu0 0.0
    %483 = vmatpush2.msra.mxu0 0.0
    %484 = vmatprep.mubr.f32.mxu0 0.0
    %485 = vmatmul.mubr.f32.gmra.mxu0 %v409
    %v486 = vpop.f32.mrf.mxu0
    %v487 = vadd.f32 %v419, %v486
    %v488 = vpop.f32.mrf.mxu0
    %489 = vdwg.mxu0
    %490 = vst [vmem:[#allocation3] sm:$0x1] %v487
    // Predicated region
    $region22: #{tpu_custom_call.1} parent=1 // pred_check
      _
    $region23: #{tpu_custom_call.1} parent=1 // pred_check_branch
      %492 = sbr.rel (0) target = $region25
    $region24: #{tpu_custom_call.1} parent=1 // pred_region
      %s494 = ssub.s32 16, 16
      %495 = vsyncadd [#allocation4], %s494
      %s497 = sshll.u32 [#allocation3], 4
      %s498 = int_to_ptr.vmem [resolvable:$true] %s497
      %500 = dma.vmem_to_hbm [thread:$0]  %s498, 16, %s5, [#allocation4]
    $region25: #{tpu_custom_call.1} parent=1 // pred_fallthru
      _
    // Predicated region
    $region26: #{tpu_custom_call.1} parent=1 // pred_check
      _
    $region27: #{tpu_custom_call.1} parent=1 // pred_check_branch
      %502 = sbr.rel (0) target = $region29
    $region28: #{tpu_custom_call.1} parent=1 // pred_region
      %503 = dma.done [#allocation4], 16
    $region29: #{tpu_custom_call.1} parent=1 // pred_fallthru
      _
    %504 = vsyncpa [#allocation4], 1

</llo_original>
